<compile_context>
chip_gen: v7x
topology: tpu7x:2x2x1
jax: 0.10.0
libtpu: 0.0.40
codegen_flags: <defaults>
</compile_context>

<pallas_src>
import jax
import jax.numpy as jnp
from jax.experimental import pallas as pl
from jax.experimental.pallas import tpu as pltpu

_MIB = 1024 * 1024


def _round_up(x: int, m: int) -> int:
    return (x + m - 1) // m * m


# ---------------------------------------------------------------------------
# Hardware queries (trace-time; safe fallbacks if unavailable).
# ---------------------------------------------------------------------------
def _vmem_capacity_bytes() -> int:
    try:
        return int(pltpu.get_tpu_info().vmem_capacity_bytes)
    except Exception:
        return 64 * _MIB          # conservative default: v7x per-TensorCore VMEM


def _single_buffer_available() -> bool:
    """Whether BlockSpec(pipeline_mode=pl.Buffered(1)) is supported."""
    if not hasattr(pl, "Buffered"):
        return False
    try:
        pl.BlockSpec((8, 128), lambda i: (i, 0), pipeline_mode=pl.Buffered(1))
        return True
    except Exception:
        return False


def _spec(shape, index_map, *, grid_constant=False, single_buffer=False):
    """BlockSpec; grid-constant blocks get single-buffered (halves their VMEM)."""
    if grid_constant and single_buffer:
        return pl.BlockSpec(shape, index_map, pipeline_mode=pl.Buffered(1))
    return pl.BlockSpec(shape, index_map)


# ---------------------------------------------------------------------------
# Kernels
# ---------------------------------------------------------------------------
def _mlp_kernel_resident(x_ref, w1_ref, b1_ref, w2_ref, b2_ref, o_ref, h_ref):
    """Grid (batch_tiles, out_tiles); block_h == H.

    W1/b1 are grid-constant (fetched once, resident in VMEM).  fc1 (+ReLU) is
    computed once per batch tile into the persistent scratch h_ref and reused
    for every output tile; fc2 writes straight to the output block (f32 MXU
    accumulation, no separate accumulator)."""
    @pl.when(pl.program_id(1) == 0)
    def _():
        h = jnp.dot(x_ref[...], w1_ref[...], preferred_element_type=jnp.float32)
        h_ref[...] = jnp.maximum(h + b1_ref[...], 0.0).astype(h_ref.dtype)

    o_ref[...] = (jnp.dot(h_ref[...], w2_ref[...],
                          preferred_element_type=jnp.float32)
                  + b2_ref[...]).astype(o_ref.dtype)


def _mlp_kernel_hidden_tiled(x_ref, w1_ref, b1_ref, w2_ref, b2_ref, o_ref,
                             acc_ref):
    """Grid (batch_tiles, out_tiles, hidden_tiles); hidden is the reduction
    (last, "arbitrary") axis with an f32 VMEM accumulator zeroed/finalized via
    pl.when.  Used only when W1 cannot stay fully resident in VMEM."""
    h_idx = pl.program_id(2)

    @pl.when(h_idx == 0)
    def _():
        acc_ref[...] = jnp.zeros_like(acc_ref)

    h = jnp.dot(x_ref[...], w1_ref[...], preferred_element_type=jnp.float32)
    h = jnp.maximum(h + b1_ref[...], 0.0)
    acc_ref[...] += jnp.dot(h.astype(w2_ref.dtype), w2_ref[...],
                            preferred_element_type=jnp.float32)

    @pl.when(h_idx == pl.num_programs(2) - 1)
    def _():
        o_ref[...] = (acc_ref[...] + b2_ref[...]).astype(o_ref.dtype)


# ---------------------------------------------------------------------------
# Parameter preparation (hoisted out of the per-call path)
# ---------------------------------------------------------------------------
def prepare_mlp1_params(w1, b1, w2, b2, *, compute_dtype=jnp.bfloat16):
    """Pad feature dims to lane-dense multiples of 128 and cast the weights to
    the MXU compute dtype ONCE.  w1: [n_in, n_hid], b1: [n_hid],
    w2: [n_hid, n_out], b2: [n_out].  Zero padding is exact: padded hidden
    columns give relu(0+0)=0 and contribute nothing."""
    n_in, n_hid = w1.shape
    n_out = w2.shape[1]
    K, H, N = (_round_up(d, 128) for d in (n_in, n_hid, n_out))

    w1_p = jnp.pad(w1.astype(compute_dtype), ((0, K - n_in), (0, H - n_hid)))
    w2_p = jnp.pad(w2.astype(compute_dtype), ((0, H - n_hid), (0, N - n_out)))
    b1_p = jnp.pad(b1.astype(jnp.float32), (0, H - n_hid)).reshape(1, H)
    b2_p = jnp.pad(b2.astype(jnp.float32), (0, N - n_out)).reshape(1, N)
    return dict(w1=w1_p, b1=b1_p, w2=w2_p, b2=b2_p,
                n_in=n_in, n_hid=n_hid, n_out=n_out,
                compute_dtype=jnp.dtype(compute_dtype))


# ---------------------------------------------------------------------------
# Tile selection
# ---------------------------------------------------------------------------
def _tile_candidates(full, preferred=(2048, 1024, 512, 256, 128)):
    """Descending tile sizes (multiples of 128, preferring 256-multiples that
    fill the v6e/v7x MXU; 128 already fills the v5e MXU) that divide `full`."""
    cands = {full}
    for v in preferred:
        if v < full and full % v == 0:
            cands.add(v)
    return sorted(cands, reverse=True)


def _vmem_estimate(block_b, block_n, block_h, K, gh, gn,
                   in_size, out_size, single_buffer):
    """Rough per-step VMEM footprint in bytes (pipeline buffers + scratch +
    in-kernel temporaries)."""
    def nbuf(constant):
        return 1 if (constant and single_buffer) else 2
    w1_const = gh == 1
    w2_const = gh == 1 and gn == 1
    total = block_b * K * in_size * 2                        # x tile
    total += K * block_h * in_size * nbuf(w1_const)          # w1
    total += 8 * block_h * 4 * nbuf(w1_const)                # b1 (sublane-padded)
    total += block_h * block_n * in_size * nbuf(w2_const)    # w2
    total += 8 * block_n * 4 * nbuf(gn == 1)                 # b2
    total += block_b * block_n * out_size * 2                # out tile
    if gh == 1:
        total += block_b * block_h * (in_size + 4)           # h scratch + f32 temp
    else:
        total += block_b * block_n * 4                       # f32 accumulator
        total += block_b * block_h * (in_size + 4)           # fc1 temp + cast
    return total


def _choose_tiling(B, K, H, N, in_size, out_size, budget, single_buffer):
    b_align = 16 if in_size == 2 else 8        # bf16 packs 2 rows per sublane
    # Full-MXU batch tiles; never halve a 256-row tile just to add grid steps.
    block_b = 256 if B >= 256 else _round_up(B, b_align)

    n_cands = _tile_candidates(N)
    h_cands = _tile_candidates(H)

    while True:
        # (1) Hidden resident: block_h == H -> W1 grid-constant (fetched from
        #     HBM once, kept in VMEM across every batch/output tile) and the
        #     fc1 result cached in scratch.  Prefer the largest output tile.
        for bn in n_cands:
            if _vmem_estimate(block_b, bn, H, K, 1, N // bn,
                              in_size, out_size, single_buffer) <= budget:
                return block_b, bn, H
        # (2) Hidden tiled (reduction axis): largest output tile first (fewest
        #     W1 re-streams from HBM), then largest hidden chunk (fewest f32
        #     accumulator read-modify-writes and grid-step overheads).
        for bn in n_cands:
            for bh in h_cands:
                if bh == H:
                    continue
                if _vmem_estimate(block_b, bn, bh, K, H // bh, N // bn,
                                  in_size, out_size, single_buffer) <= budget:
                    return block_b, bn, bh
        if block_b <= b_align:
            # Nothing fits even at the minimum batch tile: take the smallest
            # configuration and rely on the raised scoped-VMEM limit.
            return block_b, n_cands[-1], h_cands[-1]
        block_b = max(b_align, _round_up(block_b // 2, b_align))


# ---------------------------------------------------------------------------
# Forward pass
# ---------------------------------------------------------------------------
def mlp1layer_apply(params, x, *, vmem_limit_bytes=None, interpret=False):
    """out = relu(x @ w1 + b1) @ w2 + b2 with pre-padded/cast params."""
    B, n_in = x.shape
    assert n_in == params["n_in"], "input feature dim mismatch"
    n_out = params["n_out"]
    cdt = params["compute_dtype"]
    w1_p, b1_p, w2_p, b2_p = params["w1"], params["b1"], params["w2"], params["b2"]
    K, H = w1_p.shape
    N = w2_p.shape[1]
    out_dtype = x.dtype

    in_size = jnp.dtype(cdt).itemsize
    out_size = jnp.dtype(out_dtype).itemsize

    if vmem_limit_bytes is None:
        # Generation-aware: half of physical VMEM -> 64 MiB on v5e/v6e
        # (128 MiB/TC) but only 32 MiB on v7x (64 MiB/TC).
        vmem_limit_bytes = min(_vmem_capacity_bytes() // 2, 64 * _MIB)
    budget = int(vmem_limit_bytes * 0.85)      # headroom for compiler temps

    single_buffer = _single_buffer_available()
    block_b, block_n, block_h = _choose_tiling(
        B, K, H, N, in_size, out_size, budget, single_buffer)

    B_pad = _round_up(B, block_b)
    gb, gn, gh = B_pad // block_b, N // block_n, H // block_h

    # Per-call padding of the activations only (weights were padded/cast once).
    x_p = x.astype(cdt) if x.dtype != cdt else x
    if (B_pad, K) != (B, n_in):
        x_p = jnp.pad(x_p, ((0, B_pad - B), (0, K - n_in)))

    # HBM traffic model including weight re-reads (advisory scheduler hint).
    w1_reads = 1 if gh == 1 else gb * gn
    w2_reads = 1 if (gh == 1 and gn == 1) else gb
    cost = pl.CostEstimate(
        flops=2 * B_pad * (K * H + H * N),
        transcendentals=0,
        bytes_accessed=(x_p.size * in_size
                        + w1_p.size * in_size * w1_reads
                        + w2_p.size * in_size * w2_reads
                        + b1_p.size * 4 + b2_p.size * 4
                        + B_pad * N * out_size),
    )

    def launch(use_single_buffer):
        if gh == 1:
            grid = (gb, gn)
            in_specs = [
                _spec((block_b, K), lambda i, n: (i, 0),
                      grid_constant=(gb == 1), single_buffer=use_single_buffer),
                _spec((K, H), lambda i, n: (0, 0),
                      grid_constant=True, single_buffer=use_single_buffer),
                _spec((1, H), lambda i, n: (0, 0),
                      grid_constant=True, single_buffer=use_single_buffer),
                _spec((H, block_n), lambda i, n: (0, n),
                      grid_constant=(gn == 1), single_buffer=use_single_buffer),
                _spec((1, block_n), lambda i, n: (0, n),
                      grid_constant=(gn == 1), single_buffer=use_single_buffer),
            ]
            out_spec = pl.BlockSpec((block_b, block_n), lambda i, n: (i, n))
            scratch = [pltpu.VMEM((block_b, H), cdt)]      # cached relu(fc1)
            kernel = _mlp_kernel_resident
            semantics = ("parallel", "parallel")           # both TCs get tiles
        else:
            grid = (gb, gn, gh)                            # reduction axis last
            in_specs = [
                _spec((block_b, K), lambda i, n, h: (i, 0),
                      grid_constant=(gb == 1), single_buffer=use_single_buffer),
                pl.BlockSpec((K, block_h), lambda i, n, h: (0, h)),
                pl.BlockSpec((1, block_h), lambda i, n, h: (0, h)),
                pl.BlockSpec((block_h, block_n), lambda i, n, h: (h, n)),
                _spec((1, block_n), lambda i, n, h: (0, n),
                      grid_constant=(gn == 1), single_buffer=use_single_buffer),
            ]
            out_spec = pl.BlockSpec((block_b, block_n), lambda i, n, h: (i, n))
            scratch = [pltpu.VMEM((block_b, block_n), jnp.float32)]
            kernel = _mlp_kernel_hidden_tiled
            semantics = ("parallel", "parallel", "arbitrary")

        return pl.pallas_call(
            kernel,
            out_shape=jax.ShapeDtypeStruct((B_pad, N), out_dtype),
            grid_spec=pltpu.PrefetchScalarGridSpec(
                num_scalar_prefetch=0,
                grid=grid,
                in_specs=in_specs,
                out_specs=out_spec,
                scratch_shapes=scratch,
            ),
            compiler_params=pltpu.CompilerParams(
                dimension_semantics=semantics,
                vmem_limit_bytes=int(vmem_limit_bytes),
            ),
            cost_estimate=cost,
            interpret=interpret,
        )(x_p, w1_p, b1_p, w2_p, b2_p)

    if single_buffer:
        try:
            out_p = launch(True)
        except Exception:
            out_p = launch(False)   # fall back if Buffered(1) is rejected
    else:
        out_p = launch(False)

    return out_p[:B, :n_out]


def mlp1layer(x, w1, b1, w2, b2, *, compute_dtype=jnp.bfloat16, **kwargs):
    """One-shot convenience wrapper (pads/casts the weights on every call;
    prefer prepare_mlp1_params + mlp1layer_apply in a serving loop)."""
    params = prepare_mlp1_params(w1, b1, w2, b2, compute_dtype=compute_dtype)
    return mlp1layer_apply(params, x, **kwargs)


if __name__ == "__main__":
    # Small shapes consistent with MLP1Layer(n_input, n_hidden, n_output).
    B, n_input, n_hidden, n_output = 8, 32, 64, 16

    key = jax.random.PRNGKey(0)
    kx, kw1, kb1, kw2, kb2 = jax.random.split(key, 5)

    x = jax.random.normal(kx, (B, n_input), dtype=jnp.float32)

    # PyTorch-like uniform(-1/sqrt(fan_in), 1/sqrt(fan_in)) init.
    bound1 = 1.0 / (n_input ** 0.5)
    w1 = jax.random.uniform(kw1, (n_input, n_hidden), dtype=jnp.float32,
                            minval=-bound1, maxval=bound1)
    b1 = jax.random.uniform(kb1, (n_hidden,), dtype=jnp.float32,
                            minval=-bound1, maxval=bound1)
    bound2 = 1.0 / (n_hidden ** 0.5)
    w2 = jax.random.uniform(kw2, (n_hidden, n_output), dtype=jnp.float32,
                            minval=-bound2, maxval=bound2)
    b2 = jax.random.uniform(kb2, (n_output,), dtype=jnp.float32,
                            minval=-bound2, maxval=bound2)

    ref = jnp.maximum(x @ w1 + b1, 0.0) @ w2 + b2

    # f32 operand path: tight tolerance vs reference (weights prepared once).
    params_f32 = prepare_mlp1_params(w1, b1, w2, b2, compute_dtype=jnp.float32)
    out_f32 = mlp1layer_apply(params_f32, x)
    jax.block_until_ready(out_f32)
    assert out_f32.shape == (B, n_output)
    assert jnp.allclose(out_f32, ref, atol=1e-5, rtol=1e-5)

    # bf16 operand / f32 accumulate path (production default, MXU-friendly).
    params_bf16 = prepare_mlp1_params(w1, b1, w2, b2)
    out_bf16 = mlp1layer_apply(params_bf16, x)
    jax.block_until_ready(out_bf16)
    assert out_bf16.shape == (B, n_output)
    assert jnp.allclose(out_bf16, ref, atol=5e-2, rtol=5e-2)

    print("KERNEL_OK")
</pallas_src>

<mosaic_0001>
module attributes {stable_mosaic.version = 11 : i64} {
  func.func @_mlp_kernel_resident(%arg0: i32, %arg1: i32, %arg2: memref<8x128xf32, #tpu.memory_space<vmem>>, %arg3: memref<128x128xf32, #tpu.memory_space<vmem>>, %arg4: memref<1x128xf32, #tpu.memory_space<vmem>>, %arg5: memref<128x128xf32, #tpu.memory_space<vmem>>, %arg6: memref<1x128xf32, #tpu.memory_space<vmem>>, %arg7: memref<8x128xf32, #tpu.memory_space<vmem>>, %arg8: memref<8x128xf32, #tpu.memory_space<vmem>>) attributes {dimension_semantics = [#tpu.dimension_semantics<parallel>, #tpu.dimension_semantics<parallel>], iteration_bounds = array<i64: 1, 1>, scalar_prefetch = 0 : i64, scratch_operands = 1 : i64, tpu.core_type = #tpu.core_type<tc>, window_params = [{pipeline_mode = #tpu.pipeline_mode<synchronous>, transform_indices = @transform_0, window_bounds = array<i64: 8, 128>}, {pipeline_mode = #tpu.pipeline_mode<synchronous>, transform_indices = @transform_1, window_bounds = array<i64: 128, 128>}, {pipeline_mode = #tpu.pipeline_mode<synchronous>, transform_indices = @transform_2, window_bounds = array<i64: 1, 128>}, {pipeline_mode = #tpu.pipeline_mode<synchronous>, transform_indices = @transform_3, window_bounds = array<i64: 128, 128>}, {pipeline_mode = #tpu.pipeline_mode<synchronous>, transform_indices = @transform_4, window_bounds = array<i64: 1, 128>}, {transform_indices = @transform_5, window_bounds = array<i64: 8, 128>}]} {
    %c0_i32 = arith.constant 0 : i32
    %0 = arith.cmpi eq, %arg1, %c0_i32 : i32
    %1 = arith.extui %0 : i1 to i32
    %c0_i32_0 = arith.constant 0 : i32
    %2 = arith.cmpi ne, %1, %c0_i32_0 : i32
    scf.if %2 {
      %c0_8 = arith.constant 0 : index
      %c0_9 = arith.constant 0 : index
      %10 = vector.load %arg2[%c0_8, %c0_9] : memref<8x128xf32, #tpu.memory_space<vmem>>, vector<8x128xf32>
      %c0_10 = arith.constant 0 : index
      %c0_11 = arith.constant 0 : index
      %11 = vector.load %arg3[%c0_10, %c0_11] : memref<128x128xf32, #tpu.memory_space<vmem>>, vector<128x128xf32>
      %cst_12 = arith.constant dense<0.000000e+00> : vector<8x128xf32>
      %12 = tpu.matmul %10, %11, %cst_12 {dimension_numbers = #tpu.dot_dimension_numbers<[1], [0], [0], [1], [0, 0, 1, 1], [], []>} : vector<8x128xf32>, vector<128x128xf32>, vector<8x128xf32> -> vector<8x128xf32>
      %c0_13 = arith.constant 0 : index
      %c0_14 = arith.constant 0 : index
      %13 = vector.load %arg4[%c0_13, %c0_14] : memref<1x128xf32, #tpu.memory_space<vmem>>, vector<1x128xf32>
      %14 = vector.broadcast %13 : vector<1x128xf32> to vector<8x128xf32>
      %15 = arith.addf %12, %14 : vector<8x128xf32>
      %cst_15 = arith.constant 0.000000e+00 : f32
      %16 = vector.broadcast %cst_15 : f32 to vector<8x128xf32>
      %17 = arith.maximumf %15, %16 : vector<8x128xf32>
      %c0_16 = arith.constant 0 : index
      %c0_17 = arith.constant 0 : index
      %18 = vector.load %arg8[%c0_16, %c0_17] : memref<8x128xf32, #tpu.memory_space<vmem>>, vector<8x128xf32>
      tpu.vector_store %arg8[%c0_16, %c0_17], %17 {strides = array<i32>} : memref<8x128xf32, #tpu.memory_space<vmem>>, vector<8x128xf32>,
    } else {
    }
    %c0 = arith.constant 0 : index
    %c0_1 = arith.constant 0 : index
    %3 = vector.load %arg8[%c0, %c0_1] : memref<8x128xf32, #tpu.memory_space<vmem>>, vector<8x128xf32>
    %c0_2 = arith.constant 0 : index
    %c0_3 = arith.constant 0 : index
    %4 = vector.load %arg5[%c0_2, %c0_3] : memref<128x128xf32, #tpu.memory_space<vmem>>, vector<128x128xf32>
    %cst = arith.constant dense<0.000000e+00> : vector<8x128xf32>
    %5 = tpu.matmul %3, %4, %cst {dimension_numbers = #tpu.dot_dimension_numbers<[1], [0], [0], [1], [0, 0, 1, 1], [], []>} : vector<8x128xf32>, vector<128x128xf32>, vector<8x128xf32> -> vector<8x128xf32>
    %c0_4 = arith.constant 0 : index
    %c0_5 = arith.constant 0 : index
    %6 = vector.load %arg6[%c0_4, %c0_5] : memref<1x128xf32, #tpu.memory_space<vmem>>, vector<1x128xf32>
    %7 = vector.broadcast %6 : vector<1x128xf32> to vector<8x128xf32>
    %8 = arith.addf %5, %7 : vector<8x128xf32>
    %c0_6 = arith.constant 0 : index
    %c0_7 = arith.constant 0 : index
    %9 = vector.load %arg7[%c0_6, %c0_7] : memref<8x128xf32, #tpu.memory_space<vmem>>, vector<8x128xf32>
    tpu.vector_store %arg7[%c0_6, %c0_7], %8 {strides = array<i32>} : memref<8x128xf32, #tpu.memory_space<vmem>>, vector<8x128xf32>,
    return
  }
  func.func @transform_0(%arg0: i32, %arg1: i32) -> (i32, i32) {
    %c0_i32 = arith.constant 0 : i32
    %c0_i32_0 = arith.constant 0 : i32
    return %arg0, %c0_i32 : i32, i32
  }
  func.func @transform_1(%arg0: i32, %arg1: i32) -> (i32, i32) {
    %c0_i32 = arith.constant 0 : i32
    %c0_i32_0 = arith.constant 0 : i32
    %c0_i32_1 = arith.constant 0 : i32
    return %c0_i32, %c0_i32_0 : i32, i32
  }
  func.func @transform_2(%arg0: i32, %arg1: i32) -> (i32, i32) {
    %c0_i32 = arith.constant 0 : i32
    %c0_i32_0 = arith.constant 0 : i32
    %c0_i32_1 = arith.constant 0 : i32
    return %c0_i32, %c0_i32_0 : i32, i32
  }
  func.func @transform_3(%arg0: i32, %arg1: i32) -> (i32, i32) {
    %c0_i32 = arith.constant 0 : i32
    %c0_i32_0 = arith.constant 0 : i32
    return %c0_i32, %arg1 : i32, i32
  }
  func.func @transform_4(%arg0: i32, %arg1: i32) -> (i32, i32) {
    %c0_i32 = arith.constant 0 : i32
    %c0_i32_0 = arith.constant 0 : i32
    return %c0_i32, %arg1 : i32, i32
  }
  func.func @transform_5(%arg0: i32, %arg1: i32) -> (i32, i32) {
    %c0_i32 = arith.constant 0 : i32
    return %arg0, %arg1 : i32, i32
  }
}

module attributes {stable_mosaic.version = 11 : i64} {
  func.func @_mlp_kernel_resident(%arg0: i32, %arg1: i32, %arg2: memref<8x128xf32, #tpu.memory_space<vmem>>, %arg3: memref<128x128xf32, #tpu.memory_space<vmem>>, %arg4: memref<1x128xf32, #tpu.memory_space<vmem>>, %arg5: memref<128x128xf32, #tpu.memory_space<vmem>>, %arg6: memref<1x128xf32, #tpu.memory_space<vmem>>, %arg7: memref<8x128xf32, #tpu.memory_space<vmem>>, %arg8: memref<8x128xf32, #tpu.memory_space<vmem>>) attributes {dimension_semantics = [#tpu.dimension_semantics<parallel>, #tpu.dimension_semantics<parallel>], iteration_bounds = array<i64: 1, 1>, scalar_prefetch = 0 : i64, scratch_operands = 1 : i64, tpu.core_type = #tpu.core_type<tc>, window_params = [{transform_indices = @transform_0, window_bounds = array<i64: 8, 128>}, {pipeline_mode = #tpu.pipeline_mode<synchronous>, transform_indices = @transform_1, window_bounds = array<i64: 128, 128>}, {pipeline_mode = #tpu.pipeline_mode<synchronous>, transform_indices = @transform_2, window_bounds = array<i64: 1, 128>}, {transform_indices = @transform_3, window_bounds = array<i64: 128, 128>}, {transform_indices = @transform_4, window_bounds = array<i64: 1, 128>}, {transform_indices = @transform_5, window_bounds = array<i64: 8, 128>}]} {
    %c0_i32 = arith.constant 0 : i32
    %0 = arith.cmpi eq, %arg1, %c0_i32 : i32
    %1 = arith.extui %0 : i1 to i32
    %c0_i32_0 = arith.constant 0 : i32
    %2 = arith.cmpi ne, %1, %c0_i32_0 : i32
    scf.if %2 {
      %c0_8 = arith.constant 0 : index
      %c0_9 = arith.constant 0 : index
      %10 = vector.load %arg2[%c0_8, %c0_9] : memref<8x128xf32, #tpu.memory_space<vmem>>, vector<8x128xf32>
      %c0_10 = arith.constant 0 : index
      %c0_11 = arith.constant 0 : index
      %11 = vector.load %arg3[%c0_10, %c0_11] : memref<128x128xf32, #tpu.memory_space<vmem>>, vector<128x128xf32>
      %cst_12 = arith.constant dense<0.000000e+00> : vector<8x128xf32>
      %12 = tpu.matmul %10, %11, %cst_12 {dimension_numbers = #tpu.dot_dimension_numbers<[1], [0], [0], [1], [0, 0, 1, 1], [], []>} : vector<8x128xf32>, vector<128x128xf32>, vector<8x128xf32> -> vector<8x128xf32>
      %c0_13 = arith.constant 0 : index
      %c0_14 = arith.constant 0 : index
      %13 = vector.load %arg4[%c0_13, %c0_14] : memref<1x128xf32, #tpu.memory_space<vmem>>, vector<1x128xf32>
      %14 = vector.broadcast %13 : vector<1x128xf32> to vector<8x128xf32>
      %15 = arith.addf %12, %14 : vector<8x128xf32>
      %cst_15 = arith.constant 0.000000e+00 : f32
      %16 = vector.broadcast %cst_15 : f32 to vector<8x128xf32>
      %17 = arith.maximumf %15, %16 : vector<8x128xf32>
      %c0_16 = arith.constant 0 : index
      %c0_17 = arith.constant 0 : index
      %18 = vector.load %arg8[%c0_16, %c0_17] : memref<8x128xf32, #tpu.memory_space<vmem>>, vector<8x128xf32>
      tpu.vector_store %arg8[%c0_16, %c0_17], %17 {strides = array<i32>} : memref<8x128xf32, #tpu.memory_space<vmem>>, vector<8x128xf32>,
    } else {
    }
    %c0 = arith.constant 0 : index
    %c0_1 = arith.constant 0 : index
    %3 = vector.load %arg8[%c0, %c0_1] : memref<8x128xf32, #tpu.memory_space<vmem>>, vector<8x128xf32>
    %c0_2 = arith.constant 0 : index
    %c0_3 = arith.constant 0 : index
    %4 = vector.load %arg5[%c0_2, %c0_3] : memref<128x128xf32, #tpu.memory_space<vmem>>, vector<128x128xf32>
    %cst = arith.constant dense<0.000000e+00> : vector<8x128xf32>
    %5 = tpu.matmul %3, %4, %cst {dimension_numbers = #tpu.dot_dimension_numbers<[1], [0], [0], [1], [0, 0, 1, 1], [], []>} : vector<8x128xf32>, vector<128x128xf32>, vector<8x128xf32> -> vector<8x128xf32>
    %c0_4 = arith.constant 0 : index
    %c0_5 = arith.constant 0 : index
    %6 = vector.load %arg6[%c0_4, %c0_5] : memref<1x128xf32, #tpu.memory_space<vmem>>, vector<1x128xf32>
    %7 = vector.broadcast %6 : vector<1x128xf32> to vector<8x128xf32>
    %8 = arith.addf %5, %7 : vector<8x128xf32>
    %c0_6 = arith.constant 0 : index
    %c0_7 = arith.constant 0 : index
    %9 = vector.load %arg7[%c0_6, %c0_7] : memref<8x128xf32, #tpu.memory_space<vmem>>, vector<8x128xf32>
    tpu.vector_store %arg7[%c0_6, %c0_7], %8 {strides = array<i32>} : memref<8x128xf32, #tpu.memory_space<vmem>>, vector<8x128xf32>,
    return
  }
  func.func @transform_0(%arg0: i32, %arg1: i32) -> (i32, i32) {
    %c0_i32 = arith.constant 0 : i32
    %c0_i32_0 = arith.constant 0 : i32
    return %arg0, %c0_i32 : i32, i32
  }
  func.func @transform_1(%arg0: i32, %arg1: i32) -> (i32, i32) {
    %c0_i32 = arith.constant 0 : i32
    %c0_i32_0 = arith.constant 0 : i32
    %c0_i32_1 = arith.constant 0 : i32
    return %c0_i32, %c0_i32_0 : i32, i32
  }
  func.func @transform_2(%arg0: i32, %arg1: i32) -> (i32, i32) {
    %c0_i32 = arith.constant 0 : i32
    %c0_i32_0 = arith.constant 0 : i32
    %c0_i32_1 = arith.constant 0 : i32
    return %c0_i32, %c0_i32_0 : i32, i32
  }
  func.func @transform_3(%arg0: i32, %arg1: i32) -> (i32, i32) {
    %c0_i32 = arith.constant 0 : i32
    %c0_i32_0 = arith.constant 0 : i32
    return %c0_i32, %arg1 : i32, i32
  }
  func.func @transform_4(%arg0: i32, %arg1: i32) -> (i32, i32) {
    %c0_i32 = arith.constant 0 : i32
    %c0_i32_0 = arith.constant 0 : i32
    return %c0_i32, %arg1 : i32, i32
  }
  func.func @transform_5(%arg0: i32, %arg1: i32) -> (i32, i32) {
    %c0_i32 = arith.constant 0 : i32
    return %arg0, %arg1 : i32, i32
  }
}

</mosaic_0001>

<llo_original>
// kernel: tpu_custom_call.1
$region0: #{tpu_custom_call.1}
  #allocation0 [shape = 'u32[]', space=smem, size = 0x4, offset = 0x4, fixed_abs, tag = 'smem constant byte address 0x4 - core index']
  #allocation1 [shape = 'u32[144,128]{1,0:T(1,128)}', space=vmem, size = 0x12000, scoped, tag = 'internal scratch']
  #allocation2 [shape = 'f32[8,128]{1,0:T(8,128)}', space=vmem, size = 0x1000, scoped, tag = 'scratch operand']
  %s0 = inlined_call_operand.hbm [shape: f32[8,128], index: 0, kind: input, shape index: {}]
  %s1 = inlined_call_operand.hbm [shape: f32[128,128], index: 1, kind: input, shape index: {}]
  %s2 = inlined_call_operand.vmem [shape: f32[1,128], index: 2, kind: input, shape index: {}]
  %s3 = inlined_call_operand.hbm [shape: f32[128,128], index: 3, kind: input, shape index: {}]
  %s4 = inlined_call_operand.vmem [shape: f32[1,128], index: 4, kind: input, shape index: {}]
  %s5 = inlined_call_operand.hbm [shape: f32[8,128], index: 5, kind: output, shape index: {}]
  %s6 = sld [smem:[#allocation0]]
  $region46: #{tpu_custom_call.1} parent=0
    _
  %s8 = ssub.s32 1, %s6
  %s9 = scalar_select 0, %s8, %s6
  $region1: #{tpu_custom_call.1} parent=0
    #allocation3 [shape = 'u8[4096]{0}', space=vmem, size = 0x1000, scoped, tag = 'input window, operand 0, single buffered']
    #allocation4 [shape = 's32[1]{0}', space=sflag, size = 0x4, scoped, tag = 'scoped memory for tpu_custom_call.1']
    #allocation5 [shape = 's32[1]{0}', space=sflag, size = 0x4, scoped, tag = 'scoped memory for tpu_custom_call.1']
    #allocation6 [shape = 'u8[65536]{0}', space=vmem, size = 0x10000, scoped, tag = 'input window, operand 1, single buffered']
    #allocation7 [shape = 's32[1]{0}', space=sflag, size = 0x4, scoped, tag = 'scoped memory for tpu_custom_call.1']
    #allocation8 [shape = 'u8[65536]{0}', space=vmem, size = 0x10000, scoped, tag = 'input window, operand 3, single buffered']
    #allocation9 [shape = 'u8[4096]{0}', space=vmem, size = 0x1000, scoped, tag = 'output window, operand 0, single buffered']
    %10 = vsyncpa [#allocation4], 0
    %11 = vsyncpa [#allocation7], 0
    %12 = vsyncpa [#allocation5], 0
    // Predicated region
    $region2: #{tpu_custom_call.1} parent=1 // pred_check
      _
    $region3: #{tpu_custom_call.1} parent=1 // pred_check_branch
      %14 = sbr.rel (0) target = $region5
    $region4: #{tpu_custom_call.1} parent=1 // pred_region
      %s16 = ssub.s32 128, 128
      %17 = vsyncadd [#allocation4], %s16
      %s19 = sshll.u32 [#allocation3], 4
      %s20 = int_to_ptr.vmem [resolvable:$true] %s19
      %22 = dma.hbm_to_vmem [thread:$0]  %s0, 128, %s20, [#allocation4]
    $region5: #{tpu_custom_call.1} parent=1 // pred_fallthru
      _
    // Predicated region
    $region6: #{tpu_custom_call.1} parent=1 // pred_check
      _
    $region7: #{tpu_custom_call.1} parent=1 // pred_check_branch
      %24 = sbr.rel (0) target = $region9
    $region8: #{tpu_custom_call.1} parent=1 // pred_region
      %s26 = ssub.s32 2048, 2048
      %27 = vsyncadd [#allocation7], %s26
      %s28 = sshll.u32 [#allocation6], 4
      %s29 = int_to_ptr.vmem [resolvable:$true] %s28
      %34 = dma.hbm_to_vmem [thread:$0]  %s1, 2048, %s29, [#allocation7], 128, 128, 8
    $region9: #{tpu_custom_call.1} parent=1 // pred_fallthru
      _
    // Predicated region
    $region10: #{tpu_custom_call.1} parent=1 // pred_check
      _
    $region11: #{tpu_custom_call.1} parent=1 // pred_check_branch
      %36 = sbr.rel (0) target = $region13
    $region12: #{tpu_custom_call.1} parent=1 // pred_region
      _
    $region13: #{tpu_custom_call.1} parent=1 // pred_fallthru
      _
    // Predicated region
    $region14: #{tpu_custom_call.1} parent=1 // pred_check
      _
    $region15: #{tpu_custom_call.1} parent=1 // pred_check_branch
      %38 = sbr.rel (0) target = $region17
    $region16: #{tpu_custom_call.1} parent=1 // pred_region
      %s40 = ssub.s32 2048, 2048
      %41 = vsyncadd [#allocation7], %s40
      %s42 = sshll.u32 [#allocation8], 4
      %s43 = int_to_ptr.vmem [resolvable:$true] %s42
      %48 = dma.hbm_to_vmem [thread:$0]  %s3, 2048, %s43, [#allocation7], 128, 128, 8
    $region17: #{tpu_custom_call.1} parent=1 // pred_fallthru
      _
    // Predicated region
    $region18: #{tpu_custom_call.1} parent=1 // pred_check
      _
    $region19: #{tpu_custom_call.1} parent=1 // pred_check_branch
      %50 = sbr.rel (0) target = $region21
    $region20: #{tpu_custom_call.1} parent=1 // pred_region
      _
    $region21: #{tpu_custom_call.1} parent=1 // pred_fallthru
      _
    // Predicated region
    $region22: #{tpu_custom_call.1} parent=1 // pred_check
      _
    $region23: #{tpu_custom_call.1} parent=1 // pred_check_branch
      %52 = sbr.rel (0) target = $region25
    $region24: #{tpu_custom_call.1} parent=1 // pred_region
      %53 = dma.done [#allocation4], 128
    $region25: #{tpu_custom_call.1} parent=1 // pred_fallthru
      _
    // Predicated region
    $region26: #{tpu_custom_call.1} parent=1 // pred_check
      _
    $region27: #{tpu_custom_call.1} parent=1 // pred_check_branch
      %55 = sbr.rel (0) target = $region29
    $region28: #{tpu_custom_call.1} parent=1 // pred_region
      %56 = dma.done [#allocation7], 2048
    $region29: #{tpu_custom_call.1} parent=1 // pred_fallthru
      _
    // Predicated region
    $region30: #{tpu_custom_call.1} parent=1 // pred_check
      _
    $region31: #{tpu_custom_call.1} parent=1 // pred_check_branch
      %58 = sbr.rel (0) target = $region33
    $region32: #{tpu_custom_call.1} parent=1 // pred_region
      %59 = dma.done [#allocation7], 2048
    $region33: #{tpu_custom_call.1} parent=1 // pred_fallthru
      _
    %p60 = scmp.eq.s32.totalorder 0, 0
    // Predicated region
    $region34: #{tpu_custom_call.1} parent=1 // pred_check
      %p61 = pneg %p60
    $region35: #{tpu_custom_call.1} parent=1 // pred_check_branch
      %63 = sbr.rel (%p61) target = $region37
    $region36: #{tpu_custom_call.1} parent=1 // pred_region
      %v64 = vld [vmem:[#allocation3] sm:$0xff]
      %v65 = vld [vmem:[#allocation6] sm:$0xff]
      %v66 = vld [vmem:[#allocation6 + $0x8] sm:$0xff]
      %v67 = vld [vmem:[#allocation6 + $0x10] sm:$0xff]
      %v68 = vld [vmem:[#allocation6 + $0x18] sm:$0xff]
      %v69 = vld [vmem:[#allocation6 + $0x20] sm:$0xff]
      %v70 = vld [vmem:[#allocation6 + $0x28] sm:$0xff]
      %v71 = vld [vmem:[#allocation6 + $0x30] sm:$0xff]
      %v72 = vld [vmem:[#allocation6 + $0x38] sm:$0xff]
      %v73 = vld [vmem:[#allocation6 + $0x40] sm:$0xff]
      %v74 = vld [vmem:[#allocation6 + $0x48] sm:$0xff]
      %v75 = vld [vmem:[#allocation6 + $0x50] sm:$0xff]
      %v76 = vld [vmem:[#allocation6 + $0x58] sm:$0xff]
      %v77 = vld [vmem:[#allocation6 + $0x60] sm:$0xff]
      %v78 = vld [vmem:[#allocation6 + $0x68] sm:$0xff]
      %v79 = vld [vmem:[#allocation6 + $0x70] sm:$0xff]
      %v80 = vld [vmem:[#allocation6 + $0x78] sm:$0xff]
      %v81 = vld [vmem:[%s2] sm:$0x1]
      %v83 = vlaneseq
      %v84 = vshrl.u32 %v83, 7
      %v85 = vsub.s32 0, %v84
      %v86 = vrot.slane %v81, %v85
      %88 = vmatprep.subr.mxu0 0.0
      %89 = vmatpush1.msra.mxu0 %v65
      %90 = vmatprep.subr.mxu0 0.0
      %91 = vmatpush1.msra.mxu0 %v66
      %92 = vmatprep.subr.mxu0 0.0
      %93 = vmatpush1.msra.mxu0 %v67
      %94 = vmatprep.subr.mxu0 0.0
      %95 = vmatpush1.msra.mxu0 %v68
      %96 = vmatprep.subr.mxu0 0.0
      %97 = vmatpush1.msra.mxu0 %v69
      %98 = vmatprep.subr.mxu0 0.0
      %99 = vmatpush1.msra.mxu0 %v70
      %100 = vmatprep.subr.mxu0 0.0
      %101 = vmatpush1.msra.mxu0 %v71
      %102 = vmatprep.subr.mxu0 0.0
      %103 = vmatpush1.msra.mxu0 %v72
      %104 = vmatprep.subr.mxu0 0.0
      %105 = vmatpush1.msra.mxu0 %v73
      %106 = vmatprep.subr.mxu0 0.0
      %107 = vmatpush1.msra.mxu0 %v74
      %108 = vmatprep.subr.mxu0 0.0
      %109 = vmatpush1.msra.mxu0 %v75
      %110 = vmatprep.subr.mxu0 0.0
      %111 = vmatpush1.msra.mxu0 %v76
      %112 = vmatprep.subr.mxu0 0.0
      %113 = vmatpush1.msra.mxu0 %v77
      %114 = vmatprep.subr.mxu0 0.0
      %115 = vmatpush1.msra.mxu0 %v78
      %116 = vmatprep.subr.mxu0 0.0
      %117 = vmatpush1.msra.mxu0 %v79
      %118 = vmatprep.subr.mxu0 0.0
      %119 = vmatpush1.msra.mxu0 %v80
      %120 = vmatprep.subr.mxu0 0.0
      %121 = vmatpush1.msra.mxu0 0.0
      %122 = vmatprep.subr.mxu0 0.0
      %123 = vmatpush1.msra.mxu0 0.0
      %124 = vmatprep.subr.mxu0 0.0
      %125 = vmatpush1.msra.mxu0 0.0
      %126 = vmatprep.subr.mxu0 0.0
      %127 = vmatpush1.msra.mxu0 0.0
      %128 = vmatprep.subr.mxu0 0.0
      %129 = vmatpush1.msra.mxu0 0.0
      %130 = vmatprep.subr.mxu0 0.0
      %131 = vmatpush1.msra.mxu0 0.0
      %132 = vmatprep.subr.mxu0 0.0
      %133 = vmatpush1.msra.mxu0 0.0
      %134 = vmatprep.subr.mxu0 0.0
      %135 = vmatpush1.msra.mxu0 0.0
      %136 = vmatprep.subr.mxu0 0.0
      %137 = vmatpush1.msra.mxu0 0.0
      %138 = vmatprep.subr.mxu0 0.0
      %139 = vmatpush1.msra.mxu0 0.0
      %140 = vmatprep.subr.mxu0 0.0
      %141 = vmatpush1.msra.mxu0 0.0
      %142 = vmatprep.subr.mxu0 0.0
      %143 = vmatpush1.msra.mxu0 0.0
      %144 = vmatprep.subr.mxu0 0.0
      %145 = vmatpush1.msra.mxu0 0.0
      %146 = vmatprep.subr.mxu0 0.0
      %147 = vmatpush1.msra.mxu0 0.0
      %148 = vmatprep.subr.mxu0 0.0
      %149 = vmatpush1.msra.mxu0 0.0
      %150 = vmatprep.subr.mxu0 0.0
      %151 = vmatpush1.msra.mxu0 0.0
      %152 = vmatprep.mubr.f32.mxu0 0.0
      %153 = vmatmul.mubr.f32.gmra.mrb[0].mxu0 %v64
      %v154 = vpop.f32.mrb[0].mxu0
      %v155 = vadd.f32 %v86, %v154
      %v156 = vpop.f32.mrb[0].mxu0
      %157 = vdwg.mxu0
      %v158 = vmax.f32 %v155, 0.0
      %159 = vst [vmem:[#allocation2] sm:$0xff] %v158
    $region37: #{tpu_custom_call.1} parent=1 // pred_fallthru
      _
    %v160 = vld [vmem:[#allocation2] sm:$0xff]
    %v161 = vld [vmem:[#allocation8] sm:$0xff]
    %v162 = vld [vmem:[#allocation8 + $0x8] sm:$0xff]
    %v163 = vld [vmem:[#allocation8 + $0x10] sm:$0xff]
    %v164 = vld [vmem:[#allocation8 + $0x18] sm:$0xff]
    %v165 = vld [vmem:[#allocation8 + $0x20] sm:$0xff]
    %v166 = vld [vmem:[#allocation8 + $0x28] sm:$0xff]
    %v167 = vld [vmem:[#allocation8 + $0x30] sm:$0xff]
    %v168 = vld [vmem:[#allocation8 + $0x38] sm:$0xff]
    %v169 = vld [vmem:[#allocation8 + $0x40] sm:$0xff]
    %v170 = vld [vmem:[#allocation8 + $0x48] sm:$0xff]
    %v171 = vld [vmem:[#allocation8 + $0x50] sm:$0xff]
    %v172 = vld [vmem:[#allocation8 + $0x58] sm:$0xff]
    %v173 = vld [vmem:[#allocation8 + $0x60] sm:$0xff]
    %v174 = vld [vmem:[#allocation8 + $0x68] sm:$0xff]
    %v175 = vld [vmem:[#allocation8 + $0x70] sm:$0xff]
    %v176 = vld [vmem:[#allocation8 + $0x78] sm:$0xff]
    %v177 = vld [vmem:[%s4] sm:$0x1]
    %v179 = vlaneseq
    %v180 = vshrl.u32 %v179, 7
    %v181 = vsub.s32 0, %v180
    %v182 = vrot.slane %v177, %v181
    %184 = vmatprep.subr.mxu0 0.0
    %185 = vmatpush1.msra.mxu0 %v161
    %186 = vmatprep.subr.mxu0 0.0
    %187 = vmatpush1.msra.mxu0 %v162
    %188 = vmatprep.subr.mxu0 0.0
    %189 = vmatpush1.msra.mxu0 %v163
    %190 = vmatprep.subr.mxu0 0.0
    %191 = vmatpush1.msra.mxu0 %v164
    %192 = vmatprep.subr.mxu0 0.0
    %193 = vmatpush1.msra.mxu0 %v165
    %194 = vmatprep.subr.mxu0 0.0
    %195 = vmatpush1.msra.mxu0 %v166
    %196 = vmatprep.subr.mxu0 0.0
    %197 = vmatpush1.msra.mxu0 %v167
    %198 = vmatprep.subr.mxu0 0.0
    %199 = vmatpush1.msra.mxu0 %v168
    %200 = vmatprep.subr.mxu0 0.0
    %201 = vmatpush1.msra.mxu0 %v169
    %202 = vmatprep.subr.mxu0 0.0
    %203 = vmatpush1.msra.mxu0 %v170
    %204 = vmatprep.subr.mxu0 0.0
    %205 = vmatpush1.msra.mxu0 %v171
    %206 = vmatprep.subr.mxu0 0.0
    %207 = vmatpush1.msra.mxu0 %v172
    %208 = vmatprep.subr.mxu0 0.0
    %209 = vmatpush1.msra.mxu0 %v173
    %210 = vmatprep.subr.mxu0 0.0
    %211 = vmatpush1.msra.mxu0 %v174
    %212 = vmatprep.subr.mxu0 0.0
    %213 = vmatpush1.msra.mxu0 %v175
    %214 = vmatprep.subr.mxu0 0.0
    %215 = vmatpush1.msra.mxu0 %v176
    %216 = vmatprep.subr.mxu0 0.0
    %217 = vmatpush1.msra.mxu0 0.0
    %218 = vmatprep.subr.mxu0 0.0
    %219 = vmatpush1.msra.mxu0 0.0
    %220 = vmatprep.subr.mxu0 0.0
    %221 = vmatpush1.msra.mxu0 0.0
    %222 = vmatprep.subr.mxu0 0.0
    %223 = vmatpush1.msra.mxu0 0.0
    %224 = vmatprep.subr.mxu0 0.0
    %225 = vmatpush1.msra.mxu0 0.0
    %226 = vmatprep.subr.mxu0 0.0
    %227 = vmatpush1.msra.mxu0 0.0
    %228 = vmatprep.subr.mxu0 0.0
    %229 = vmatpush1.msra.mxu0 0.0
    %230 = vmatprep.subr.mxu0 0.0
    %231 = vmatpush1.msra.mxu0 0.0
    %232 = vmatprep.subr.mxu0 0.0
    %233 = vmatpush1.msra.mxu0 0.0
    %234 = vmatprep.subr.mxu0 0.0
    %235 = vmatpush1.msra.mxu0 0.0
    %236 = vmatprep.subr.mxu0 0.0
    %237 = vmatpush1.msra.mxu0 0.0
    %238 = vmatprep.subr.mxu0 0.0
    %239 = vmatpush1.msra.mxu0 0.0
    %240 = vmatprep.subr.mxu0 0.0
    %241 = vmatpush1.msra.mxu0 0.0
    %242 = vmatprep.subr.mxu0 0.0
    %243 = vmatpush1.msra.mxu0 0.0
    %244 = vmatprep.subr.mxu0 0.0
    %245 = vmatpush1.msra.mxu0 0.0
    %246 = vmatprep.subr.mxu0 0.0
    %247 = vmatpush1.msra.mxu0 0.0
    %248 = vmatprep.mubr.f32.mxu0 0.0
    %249 = vmatmul.mubr.f32.gmra.mrb[0].mxu0 %v160
    %v250 = vpop.f32.mrb[0].mxu0
    %v251 = vadd.f32 %v182, %v250
    %v252 = vpop.f32.mrb[0].mxu0
    %253 = vdwg.mxu0
    %254 = vst [vmem:[#allocation9] sm:$0xff] %v251
    // Predicated region
    $region38: #{tpu_custom_call.1} parent=1 // pred_check
      _
    $region39: #{tpu_custom_call.1} parent=1 // pred_check_branch
      %256 = sbr.rel (0) target = $region41
    $region40: #{tpu_custom_call.1} parent=1 // pred_region
      %s258 = ssub.s32 128, 128
      %259 = vsyncadd [#allocation5], %s258
      %s261 = sshll.u32 [#allocation9], 4
      %s262 = int_to_ptr.vmem [resolvable:$true] %s261
      %264 = dma.vmem_to_hbm [thread:$0]  %s262, 128, %s5, [#allocation5]
    $region41: #{tpu_custom_call.1} parent=1 // pred_fallthru
      _
    // Predicated region
    $region42: #{tpu_custom_call.1} parent=1 // pred_check
      _
    $region43: #{tpu_custom_call.1} parent=1 // pred_check_branch
      %266 = sbr.rel (0) target = $region45
    $region44: #{tpu_custom_call.1} parent=1 // pred_region
      %267 = dma.done [#allocation5], 128
    $region45: #{tpu_custom_call.1} parent=1 // pred_fallthru
      _
    %268 = vsyncpa [#allocation4], 1
    %269 = vsyncpa [#allocation7], 1
    %270 = vsyncpa [#allocation5], 1

// kernel: tpu_custom_call.1
$region0: #{tpu_custom_call.1}
  #allocation0 [shape = 'u32[]', space=smem, size = 0x4, offset = 0x4, fixed_abs, tag = 'smem constant byte address 0x4 - core index']
  #allocation1 [shape = 'u32[144,128]{1,0:T(1,128)}', space=vmem, size = 0x12000, scoped, tag = 'internal scratch']
  #allocation2 [shape = 'f32[8,128]{1,0:T(8,128)}', space=vmem, size = 0x1000, scoped, tag = 'scratch operand']
  %s0 = inlined_call_operand.hbm [shape: f32[8,128], index: 0, kind: input, shape index: {}]
  %s1 = inlined_call_operand.hbm [shape: f32[128,128], index: 1, kind: input, shape index: {}]
  %s2 = inlined_call_operand.vmem [shape: f32[1,128], index: 2, kind: input, shape index: {}]
  %s3 = inlined_call_operand.hbm [shape: f32[128,128], index: 3, kind: input, shape index: {}]
  %s4 = inlined_call_operand.vmem [shape: f32[1,128], index: 4, kind: input, shape index: {}]
  %s5 = inlined_call_operand.hbm [shape: f32[8,128], index: 5, kind: output, shape index: {}]
  %s6 = sld [smem:[#allocation0]]
  $region46: #{tpu_custom_call.1} parent=0
    _
  %s8 = ssub.s32 1, %s6
  %s9 = scalar_select 0, %s8, %s6
  $region1: #{tpu_custom_call.1} parent=0
    #allocation3 [shape = 'u8[4096]{0}', space=vmem, size = 0x1000, scoped, tag = 'input window, operand 0, single buffered']
    #allocation4 [shape = 's32[1]{0}', space=sflag, size = 0x4, scoped, tag = 'scoped memory for tpu_custom_call.1']
    #allocation5 [shape = 's32[1]{0}', space=sflag, size = 0x4, scoped, tag = 'scoped memory for tpu_custom_call.1']
    #allocation6 [shape = 'u8[65536]{0}', space=vmem, size = 0x10000, scoped, tag = 'input window, operand 1, single buffered']
    #allocation7 [shape = 's32[1]{0}', space=sflag, size = 0x4, scoped, tag = 'scoped memory for tpu_custom_call.1']
    #allocation8 [shape = 'u8[65536]{0}', space=vmem, size = 0x10000, scoped, tag = 'input window, operand 3, single buffered']
    #allocation9 [shape = 'u8[4096]{0}', space=vmem, size = 0x1000, scoped, tag = 'output window, operand 0, single buffered']
    %10 = vsyncpa [#allocation4], 0
    %11 = vsyncpa [#allocation7], 0
    %12 = vsyncpa [#allocation5], 0
    // Predicated region
    $region2: #{tpu_custom_call.1} parent=1 // pred_check
      _
    $region3: #{tpu_custom_call.1} parent=1 // pred_check_branch
      %14 = sbr.rel (0) target = $region5
    $region4: #{tpu_custom_call.1} parent=1 // pred_region
      %s16 = ssub.s32 128, 128
      %17 = vsyncadd [#allocation4], %s16
      %s19 = sshll.u32 [#allocation3], 4
      %s20 = int_to_ptr.vmem [resolvable:$true] %s19
      %22 = dma.hbm_to_vmem [thread:$0]  %s0, 128, %s20, [#allocation4]
    $region5: #{tpu_custom_call.1} parent=1 // pred_fallthru
      _
    // Predicated region
    $region6: #{tpu_custom_call.1} parent=1 // pred_check
      _
    $region7: #{tpu_custom_call.1} parent=1 // pred_check_branch
      %24 = sbr.rel (0) target = $region9
    $region8: #{tpu_custom_call.1} parent=1 // pred_region
      %s26 = ssub.s32 2048, 2048
      %27 = vsyncadd [#allocation7], %s26
      %s28 = sshll.u32 [#allocation6], 4
      %s29 = int_to_ptr.vmem [resolvable:$true] %s28
      %34 = dma.hbm_to_vmem [thread:$0]  %s1, 2048, %s29, [#allocation7], 128, 128, 8
    $region9: #{tpu_custom_call.1} parent=1 // pred_fallthru
      _
    // Predicated region
    $region10: #{tpu_custom_call.1} parent=1 // pred_check
      _
    $region11: #{tpu_custom_call.1} parent=1 // pred_check_branch
      %36 = sbr.rel (0) target = $region13
    $region12: #{tpu_custom_call.1} parent=1 // pred_region
      _
    $region13: #{tpu_custom_call.1} parent=1 // pred_fallthru
      _
    // Predicated region
    $region14: #{tpu_custom_call.1} parent=1 // pred_check
      _
    $region15: #{tpu_custom_call.1} parent=1 // pred_check_branch
      %38 = sbr.rel (0) target = $region17
    $region16: #{tpu_custom_call.1} parent=1 // pred_region
      %s40 = ssub.s32 2048, 2048
      %41 = vsyncadd [#allocation7], %s40
      %s42 = sshll.u32 [#allocation8], 4
      %s43 = int_to_ptr.vmem [resolvable:$true] %s42
      %48 = dma.hbm_to_vmem [thread:$0]  %s3, 2048, %s43, [#allocation7], 128, 128, 8
    $region17: #{tpu_custom_call.1} parent=1 // pred_fallthru
      _
    // Predicated region
    $region18: #{tpu_custom_call.1} parent=1 // pred_check
      _
    $region19: #{tpu_custom_call.1} parent=1 // pred_check_branch
      %50 = sbr.rel (0) target = $region21
    $region20: #{tpu_custom_call.1} parent=1 // pred_region
      _
    $region21: #{tpu_custom_call.1} parent=1 // pred_fallthru
      _
    // Predicated region
    $region22: #{tpu_custom_call.1} parent=1 // pred_check
      _
    $region23: #{tpu_custom_call.1} parent=1 // pred_check_branch
      %52 = sbr.rel (0) target = $region25
    $region24: #{tpu_custom_call.1} parent=1 // pred_region
      %53 = dma.done [#allocation4], 128
    $region25: #{tpu_custom_call.1} parent=1 // pred_fallthru
      _
    // Predicated region
    $region26: #{tpu_custom_call.1} parent=1 // pred_check
      _
    $region27: #{tpu_custom_call.1} parent=1 // pred_check_branch
      %55 = sbr.rel (0) target = $region29
    $region28: #{tpu_custom_call.1} parent=1 // pred_region
      %56 = dma.done [#allocation7], 2048
    $region29: #{tpu_custom_call.1} parent=1 // pred_fallthru
      _
    // Predicated region
    $region30: #{tpu_custom_call.1} parent=1 // pred_check
      _
    $region31: #{tpu_custom_call.1} parent=1 // pred_check_branch
      %58 = sbr.rel (0) target = $region33
    $region32: #{tpu_custom_call.1} parent=1 // pred_region
      %59 = dma.done [#allocation7], 2048
    $region33: #{tpu_custom_call.1} parent=1 // pred_fallthru
      _
    %p60 = scmp.eq.s32.totalorder 0, 0
    // Predicated region
    $region34: #{tpu_custom_call.1} parent=1 // pred_check
      %p61 = pneg %p60
    $region35: #{tpu_custom_call.1} parent=1 // pred_check_branch
      %63 = sbr.rel (%p61) target = $region37
    $region36: #{tpu_custom_call.1} parent=1 // pred_region
      %v64 = vld [vmem:[#allocation3] sm:$0xff]
      %v65 = vld [vmem:[#allocation6] sm:$0xff]
      %v66 = vld [vmem:[#allocation6 + $0x8] sm:$0xff]
      %v67 = vld [vmem:[#allocation6 + $0x10] sm:$0xff]
      %v68 = vld [vmem:[#allocation6 + $0x18] sm:$0xff]
      %v69 = vld [vmem:[#allocation6 + $0x20] sm:$0xff]
      %v70 = vld [vmem:[#allocation6 + $0x28] sm:$0xff]
      %v71 = vld [vmem:[#allocation6 + $0x30] sm:$0xff]
      %v72 = vld [vmem:[#allocation6 + $0x38] sm:$0xff]
      %v73 = vld [vmem:[#allocation6 + $0x40] sm:$0xff]
      %v74 = vld [vmem:[#allocation6 + $0x48] sm:$0xff]
      %v75 = vld [vmem:[#allocation6 + $0x50] sm:$0xff]
      %v76 = vld [vmem:[#allocation6 + $0x58] sm:$0xff]
      %v77 = vld [vmem:[#allocation6 + $0x60] sm:$0xff]
      %v78 = vld [vmem:[#allocation6 + $0x68] sm:$0xff]
      %v79 = vld [vmem:[#allocation6 + $0x70] sm:$0xff]
      %v80 = vld [vmem:[#allocation6 + $0x78] sm:$0xff]
      %v81 = vld [vmem:[%s2] sm:$0x1]
      %v83 = vlaneseq
      %v84 = vshrl.u32 %v83, 7
      %v85 = vsub.s32 0, %v84
      %v86 = vrot.slane %v81, %v85
      %88 = vmatprep.subr.mxu0 0.0
      %89 = vmatpush1.msra.mxu0 %v65
      %90 = vmatprep.subr.mxu0 0.0
      %91 = vmatpush1.msra.mxu0 %v66
      %92 = vmatprep.subr.mxu0 0.0
      %93 = vmatpush1.msra.mxu0 %v67
      %94 = vmatprep.subr.mxu0 0.0
      %95 = vmatpush1.msra.mxu0 %v68
      %96 = vmatprep.subr.mxu0 0.0
      %97 = vmatpush1.msra.mxu0 %v69
      %98 = vmatprep.subr.mxu0 0.0
      %99 = vmatpush1.msra.mxu0 %v70
      %100 = vmatprep.subr.mxu0 0.0
      %101 = vmatpush1.msra.mxu0 %v71
      %102 = vmatprep.subr.mxu0 0.0
      %103 = vmatpush1.msra.mxu0 %v72
      %104 = vmatprep.subr.mxu0 0.0
      %105 = vmatpush1.msra.mxu0 %v73
      %106 = vmatprep.subr.mxu0 0.0
      %107 = vmatpush1.msra.mxu0 %v74
      %108 = vmatprep.subr.mxu0 0.0
      %109 = vmatpush1.msra.mxu0 %v75
      %110 = vmatprep.subr.mxu0 0.0
      %111 = vmatpush1.msra.mxu0 %v76
      %112 = vmatprep.subr.mxu0 0.0
      %113 = vmatpush1.msra.mxu0 %v77
      %114 = vmatprep.subr.mxu0 0.0
      %115 = vmatpush1.msra.mxu0 %v78
      %116 = vmatprep.subr.mxu0 0.0
      %117 = vmatpush1.msra.mxu0 %v79
      %118 = vmatprep.subr.mxu0 0.0
      %119 = vmatpush1.msra.mxu0 %v80
      %120 = vmatprep.subr.mxu0 0.0
      %121 = vmatpush1.msra.mxu0 0.0
      %122 = vmatprep.subr.mxu0 0.0
      %123 = vmatpush1.msra.mxu0 0.0
      %124 = vmatprep.subr.mxu0 0.0
      %125 = vmatpush1.msra.mxu0 0.0
      %126 = vmatprep.subr.mxu0 0.0
      %127 = vmatpush1.msra.mxu0 0.0
      %128 = vmatprep.subr.mxu0 0.0
      %129 = vmatpush1.msra.mxu0 0.0
      %130 = vmatprep.subr.mxu0 0.0
      %131 = vmatpush1.msra.mxu0 0.0
      %132 = vmatprep.subr.mxu0 0.0
      %133 = vmatpush1.msra.mxu0 0.0
      %134 = vmatprep.subr.mxu0 0.0
      %135 = vmatpush1.msra.mxu0 0.0
      %136 = vmatprep.subr.mxu0 0.0
      %137 = vmatpush1.msra.mxu0 0.0
      %138 = vmatprep.subr.mxu0 0.0
      %139 = vmatpush1.msra.mxu0 0.0
      %140 = vmatprep.subr.mxu0 0.0
      %141 = vmatpush1.msra.mxu0 0.0
      %142 = vmatprep.subr.mxu0 0.0
      %143 = vmatpush1.msra.mxu0 0.0
      %144 = vmatprep.subr.mxu0 0.0
      %145 = vmatpush1.msra.mxu0 0.0
      %146 = vmatprep.subr.mxu0 0.0
      %147 = vmatpush1.msra.mxu0 0.0
      %148 = vmatprep.subr.mxu0 0.0
      %149 = vmatpush1.msra.mxu0 0.0
      %150 = vmatprep.subr.mxu0 0.0
      %151 = vmatpush1.msra.mxu0 0.0
      %152 = vmatprep.mubr.f32.mxu0 0.0
      %153 = vmatmul.mubr.f32.gmra.mrb[0].mxu0 %v64
      %v154 = vpop.f32.mrb[0].mxu0
      %v155 = vadd.f32 %v86, %v154
      %v156 = vpop.f32.mrb[0].mxu0
      %157 = vdwg.mxu0
      %v158 = vmax.f32 %v155, 0.0
      %159 = vst [vmem:[#allocation2] sm:$0xff] %v158
    $region37: #{tpu_custom_call.1} parent=1 // pred_fallthru
      _
    %v160 = vld [vmem:[#allocation2] sm:$0xff]
    %v161 = vld [vmem:[#allocation8] sm:$0xff]
    %v162 = vld [vmem:[#allocation8 + $0x8] sm:$0xff]
    %v163 = vld [vmem:[#allocation8 + $0x10] sm:$0xff]
    %v164 = vld [vmem:[#allocation8 + $0x18] sm:$0xff]
    %v165 = vld [vmem:[#allocation8 + $0x20] sm:$0xff]
    %v166 = vld [vmem:[#allocation8 + $0x28] sm:$0xff]
    %v167 = vld [vmem:[#allocation8 + $0x30] sm:$0xff]
    %v168 = vld [vmem:[#allocation8 + $0x38] sm:$0xff]
    %v169 = vld [vmem:[#allocation8 + $0x40] sm:$0xff]
    %v170 = vld [vmem:[#allocation8 + $0x48] sm:$0xff]
    %v171 = vld [vmem:[#allocation8 + $0x50] sm:$0xff]
    %v172 = vld [vmem:[#allocation8 + $0x58] sm:$0xff]
    %v173 = vld [vmem:[#allocation8 + $0x60] sm:$0xff]
    %v174 = vld [vmem:[#allocation8 + $0x68] sm:$0xff]
    %v175 = vld [vmem:[#allocation8 + $0x70] sm:$0xff]
    %v176 = vld [vmem:[#allocation8 + $0x78] sm:$0xff]
    %v177 = vld [vmem:[%s4] sm:$0x1]
    %v179 = vlaneseq
    %v180 = vshrl.u32 %v179, 7
    %v181 = vsub.s32 0, %v180
    %v182 = vrot.slane %v177, %v181
    %184 = vmatprep.subr.mxu0 0.0
    %185 = vmatpush1.msra.mxu0 %v161
    %186 = vmatprep.subr.mxu0 0.0
    %187 = vmatpush1.msra.mxu0 %v162
    %188 = vmatprep.subr.mxu0 0.0
    %189 = vmatpush1.msra.mxu0 %v163
    %190 = vmatprep.subr.mxu0 0.0
    %191 = vmatpush1.msra.mxu0 %v164
    %192 = vmatprep.subr.mxu0 0.0
    %193 = vmatpush1.msra.mxu0 %v165
    %194 = vmatprep.subr.mxu0 0.0
    %195 = vmatpush1.msra.mxu0 %v166
    %196 = vmatprep.subr.mxu0 0.0
    %197 = vmatpush1.msra.mxu0 %v167
    %198 = vmatprep.subr.mxu0 0.0
    %199 = vmatpush1.msra.mxu0 %v168
    %200 = vmatprep.subr.mxu0 0.0
    %201 = vmatpush1.msra.mxu0 %v169
    %202 = vmatprep.subr.mxu0 0.0
    %203 = vmatpush1.msra.mxu0 %v170
    %204 = vmatprep.subr.mxu0 0.0
    %205 = vmatpush1.msra.mxu0 %v171
    %206 = vmatprep.subr.mxu0 0.0
    %207 = vmatpush1.msra.mxu0 %v172
    %208 = vmatprep.subr.mxu0 0.0
    %209 = vmatpush1.msra.mxu0 %v173
    %210 = vmatprep.subr.mxu0 0.0
    %211 = vmatpush1.msra.mxu0 %v174
    %212 = vmatprep.subr.mxu0 0.0
    %213 = vmatpush1.msra.mxu0 %v175
    %214 = vmatprep.subr.mxu0 0.0
    %215 = vmatpush1.msra.mxu0 %v176
    %216 = vmatprep.subr.mxu0 0.0
    %217 = vmatpush1.msra.mxu0 0.0
    %218 = vmatprep.subr.mxu0 0.0
    %219 = vmatpush1.msra.mxu0 0.0
    %220 = vmatprep.subr.mxu0 0.0
    %221 = vmatpush1.msra.mxu0 0.0
    %222 = vmatprep.subr.mxu0 0.0
    %223 = vmatpush1.msra.mxu0 0.0
    %224 = vmatprep.subr.mxu0 0.0
    %225 = vmatpush1.msra.mxu0 0.0
    %226 = vmatprep.subr.mxu0 0.0
    %227 = vmatpush1.msra.mxu0 0.0
    %228 = vmatprep.subr.mxu0 0.0
    %229 = vmatpush1.msra.mxu0 0.0
    %230 = vmatprep.subr.mxu0 0.0
    %231 = vmatpush1.msra.mxu0 0.0
    %232 = vmatprep.subr.mxu0 0.0
    %233 = vmatpush1.msra.mxu0 0.0
    %234 = vmatprep.subr.mxu0 0.0
    %235 = vmatpush1.msra.mxu0 0.0
    %236 = vmatprep.subr.mxu0 0.0
    %237 = vmatpush1.msra.mxu0 0.0
    %238 = vmatprep.subr.mxu0 0.0
    %239 = vmatpush1.msra.mxu0 0.0
    %240 = vmatprep.subr.mxu0 0.0
    %241 = vmatpush1.msra.mxu0 0.0
    %242 = vmatprep.subr.mxu0 0.0
    %243 = vmatpush1.msra.mxu0 0.0
    %244 = vmatprep.subr.mxu0 0.0
    %245 = vmatpush1.msra.mxu0 0.0
    %246 = vmatprep.subr.mxu0 0.0
    %247 = vmatpush1.msra.mxu0 0.0
    %248 = vmatprep.mubr.f32.mxu0 0.0
    %249 = vmatmul.mubr.f32.gmra.mrb[0].mxu0 %v160
    %v250 = vpop.f32.mrb[0].mxu0
    %v251 = vadd.f32 %v182, %v250
    %v252 = vpop.f32.mrb[0].mxu0
    %253 = vdwg.mxu0
    %254 = vst [vmem:[#allocation9] sm:$0xff] %v251
    // Predicated region
    $region38: #{tpu_custom_call.1} parent=1 // pred_check
      _
    $region39: #{tpu_custom_call.1} parent=1 // pred_check_branch
      %256 = sbr.rel (0) target = $region41
    $region40: #{tpu_custom_call.1} parent=1 // pred_region
      %s258 = ssub.s32 128, 128
      %259 = vsyncadd [#allocation5], %s258
      %s261 = sshll.u32 [#allocation9], 4
      %s262 = int_to_ptr.vmem [resolvable:$true] %s261
      %264 = dma.vmem_to_hbm [thread:$0]  %s262, 128, %s5, [#allocation5]
    $region41: #{tpu_custom_call.1} parent=1 // pred_fallthru
      _
    // Predicated region
    $region42: #{tpu_custom_call.1} parent=1 // pred_check
      _
    $region43: #{tpu_custom_call.1} parent=1 // pred_check_branch
      %266 = sbr.rel (0) target = $region45
    $region44: #{tpu_custom_call.1} parent=1 // pred_region
      %267 = dma.done [#allocation5], 128
    $region45: #{tpu_custom_call.1} parent=1 // pred_fallthru
      _
    %268 = vsyncpa [#allocation4], 1
    %269 = vsyncpa [#allocation7], 1
    %270 = vsyncpa [#allocation5], 1

</llo_original>
